<compile_context>
chip_gen: v7x
topology: tpu7x:2x2x1
jax: 0.10.0
libtpu: 0.0.40
codegen_flags: <defaults>
</compile_context>

<pallas_src>
import math

import jax
import jax.numpy as jnp
from jax.experimental import pallas as pl
from jax.experimental.pallas import tpu as pltpu

IN_F, HID, OUT_F = 6, 64, 3


def mlp_kernel(x_ref, w1_ref, b1_ref, w2_ref, b2_ref, o_ref):
    # x_ref : (6, TILE_B)   batch on the lane axis
    # w1_ref: (64, 6), b1_ref: (64, 1)
    # w2_ref: (3, 64), b2_ref: (3, 1)
    # o_ref : (3, TILE_B)
    h = jnp.dot(w1_ref[...], x_ref[...], preferred_element_type=jnp.float32)
    h = jnp.tanh(h + b1_ref[...])                        # (64, TILE_B), EUP-bound
    y = jnp.dot(w2_ref[...], h, preferred_element_type=jnp.float32)
    o_ref[...] = (y + b2_ref[...]).astype(o_ref.dtype)   # (3, TILE_B), lane-dense


def _choose_tile(B, tile_b):
    """Pick the batch tile.

    - tiny B (<=128): one full-extent block (any B allowed, no padding).
    - otherwise: multiple of 128, capped at tile_b, and no larger than
      ceil(B/2) rounded up to 128 so the grid has >= 2 blocks (v7x megacore).
    """
    tile_b = max(128, (tile_b // 128) * 128)
    if B <= 128:
        return B
    half = -(-B // 2)
    half = -(-half // 128) * 128
    return min(tile_b, half)


def network_forward(x, w1, b1, w2, b2, *, tile_b=8192):
    """Forward pass of Network.

    x : (B, 6) f32
    w1: (6, 64), b1: (64,)   -- first Linear, stored (in, out)
    w2: (64, 3), b2: (3,)    -- second Linear, stored (in, out)
    returns (B, 3) f32, same math as PyTorch's x @ W.T + b chain.
    """
    B = x.shape[0]
    tile = _choose_tile(B, tile_b)
    n_tiles = pl.cdiv(B, tile)   # last block may be partial; Pallas masks OOB writes

    # Layout plumbing (feature-major activations, (out,in) weights, (out,1)
    # biases).  allow_input_fusion below lets XLA fuse these transposes into
    # the pallas_call operands instead of a standalone HBM pass.
    x_t = x.T                      # (6, B)
    w1_t = jnp.transpose(w1)       # (64, 6)
    w2_t = jnp.transpose(w2)       # (3, 64)
    b1_c = b1.reshape(HID, 1)
    b2_c = b2.reshape(OUT_F, 1)

    cost = pl.CostEstimate(
        flops=2 * (IN_F * HID + HID * OUT_F) * B,
        transcendentals=HID * B,
        bytes_accessed=4 * (IN_F + OUT_F) * B
        + 4 * (IN_F * HID + HID + HID * OUT_F + OUT_F),
    )

    # Rough per-step VMEM: double-buffered x (6*tile) + out (3*tile) + hidden
    # (64, tile) f32 intermediate, plus slack for weights/misc.
    vmem_bytes = 4 * tile * (2 * IN_F + 2 * OUT_F + 2 * HID) + (1 << 20)
    cp_kwargs = dict(
        dimension_semantics=("parallel",),
        allow_input_fusion=[True, True, True, True, True],
    )
    if vmem_bytes > 24 * (1 << 20):
        cp_kwargs["vmem_limit_bytes"] = int(vmem_bytes)

    out_t = pl.pallas_call(
        mlp_kernel,
        out_shape=jax.ShapeDtypeStruct((OUT_F, B), jnp.float32),
        grid=(n_tiles,),
        in_specs=[
            pl.BlockSpec((IN_F, tile), lambda i: (0, i)),   # activations: tiled
            pl.BlockSpec((HID, IN_F), lambda i: (0, 0)),    # weights: VMEM-resident
            pl.BlockSpec((HID, 1), lambda i: (0, 0)),
            pl.BlockSpec((OUT_F, HID), lambda i: (0, 0)),
            pl.BlockSpec((OUT_F, 1), lambda i: (0, 0)),
        ],
        out_specs=pl.BlockSpec((OUT_F, tile), lambda i: (0, i)),
        compiler_params=pltpu.CompilerParams(**cp_kwargs),
        cost_estimate=cost,
    )(x_t, w1_t, b1_c, w2_t, b2_c)

    return out_t.T                 # back to (B, 3)


def init_params(key):
    """Deterministic PyTorch-style Linear init: U(-1/sqrt(fan_in), 1/sqrt(fan_in))."""
    k1, k2, k3, k4 = jax.random.split(key, 4)
    bound1 = 1.0 / math.sqrt(float(IN_F))
    bound2 = 1.0 / math.sqrt(float(HID))
    w1 = jax.random.uniform(k1, (IN_F, HID), jnp.float32, -bound1, bound1)
    b1 = jax.random.uniform(k2, (HID,), jnp.float32, -bound1, bound1)
    w2 = jax.random.uniform(k3, (HID, OUT_F), jnp.float32, -bound2, bound2)
    b2 = jax.random.uniform(k4, (OUT_F,), jnp.float32, -bound2, bound2)
    return w1, b1, w2, b2


def _reference(x, w1, b1, w2, b2):
    return jnp.tanh(x @ w1 + b1) @ w2 + b2


if __name__ == "__main__":
    key = jax.random.PRNGKey(0)
    pkey, xkey1, xkey2 = jax.random.split(key, 3)
    w1, b1, w2, b2 = init_params(pkey)

    # --- tiny batch (double-pendulum state dim = 6): single full-extent block ---
    x_small = jax.random.normal(xkey1, (2, IN_F), dtype=jnp.float32)
    out_small = jax.block_until_ready(network_forward(x_small, w1, b1, w2, b2))
    ref_small = _reference(x_small, w1, b1, w2, b2)
    assert out_small.shape == (2, OUT_F)
    assert jnp.allclose(out_small, ref_small, atol=1e-5, rtol=1e-5)

    # --- multi-tile path with a partial boundary block (200 = 128 + 72),
    #     no explicit padding; also exercises the >=2-tile (megacore) split ---
    x_big = jax.random.normal(xkey2, (200, IN_F), dtype=jnp.float32)
    out_big = jax.block_until_ready(network_forward(x_big, w1, b1, w2, b2))
    ref_big = _reference(x_big, w1, b1, w2, b2)
    assert out_big.shape == (200, OUT_F)
    assert jnp.allclose(out_big, ref_big, atol=1e-5, rtol=1e-5)

    print("KERNEL_OK")
</pallas_src>

<mosaic_0001>
module attributes {stable_mosaic.version = 11 : i64} {
  func.func @mlp_kernel(%arg0: i32, %arg1: memref<6x2xf32, #tpu.memory_space<vmem>>, %arg2: memref<64x6xf32, #tpu.memory_space<vmem>>, %arg3: memref<64x1xf32, #tpu.memory_space<vmem>>, %arg4: memref<3x64xf32, #tpu.memory_space<vmem>>, %arg5: memref<3x1xf32, #tpu.memory_space<vmem>>, %arg6: memref<3x2xf32, #tpu.memory_space<vmem>>) attributes {dimension_semantics = [#tpu.dimension_semantics<parallel>], iteration_bounds = array<i64: 1>, scalar_prefetch = 0 : i64, scratch_operands = 0 : i64, tpu.core_type = #tpu.core_type<tc>, window_params = [{transform_indices = @transform_0, window_bounds = array<i64: 6, 2>}, {pipeline_mode = #tpu.pipeline_mode<synchronous>, transform_indices = @transform_1, window_bounds = array<i64: 64, 6>}, {pipeline_mode = #tpu.pipeline_mode<synchronous>, transform_indices = @transform_2, window_bounds = array<i64: 64, 1>}, {pipeline_mode = #tpu.pipeline_mode<synchronous>, transform_indices = @transform_3, window_bounds = array<i64: 3, 64>}, {pipeline_mode = #tpu.pipeline_mode<synchronous>, transform_indices = @transform_4, window_bounds = array<i64: 3, 1>}, {transform_indices = @transform_5, window_bounds = array<i64: 3, 2>}]} {
    %c0 = arith.constant 0 : index
    %c0_0 = arith.constant 0 : index
    %0 = vector.load %arg2[%c0, %c0_0] : memref<64x6xf32, #tpu.memory_space<vmem>>, vector<64x6xf32>
    %c0_1 = arith.constant 0 : index
    %c0_2 = arith.constant 0 : index
    %1 = vector.load %arg1[%c0_1, %c0_2] : memref<6x2xf32, #tpu.memory_space<vmem>>, vector<6x2xf32>
    %cst = arith.constant dense<0.000000e+00> : vector<64x2xf32>
    %2 = tpu.matmul %0, %1, %cst {dimension_numbers = #tpu.dot_dimension_numbers<[1], [0], [0], [1], [0, 0, 1, 1], [], []>} : vector<64x6xf32>, vector<6x2xf32>, vector<64x2xf32> -> vector<64x2xf32>
    %c0_3 = arith.constant 0 : index
    %c0_4 = arith.constant 0 : index
    %3 = vector.load %arg3[%c0_3, %c0_4] : memref<64x1xf32, #tpu.memory_space<vmem>>, vector<64x1xf32>
    %4 = vector.broadcast %3 : vector<64x1xf32> to vector<64x2xf32>
    %5 = arith.addf %2, %4 : vector<64x2xf32>
    %6 = math.tanh %5 : vector<64x2xf32>
    %c0_5 = arith.constant 0 : index
    %c0_6 = arith.constant 0 : index
    %7 = vector.load %arg4[%c0_5, %c0_6] : memref<3x64xf32, #tpu.memory_space<vmem>>, vector<3x64xf32>
    %cst_7 = arith.constant dense<0.000000e+00> : vector<3x2xf32>
    %8 = tpu.matmul %7, %6, %cst_7 {dimension_numbers = #tpu.dot_dimension_numbers<[1], [0], [0], [1], [0, 0, 1, 1], [], []>} : vector<3x64xf32>, vector<64x2xf32>, vector<3x2xf32> -> vector<3x2xf32>
    %c0_8 = arith.constant 0 : index
    %c0_9 = arith.constant 0 : index
    %9 = vector.load %arg5[%c0_8, %c0_9] : memref<3x1xf32, #tpu.memory_space<vmem>>, vector<3x1xf32>
    %10 = vector.broadcast %9 : vector<3x1xf32> to vector<3x2xf32>
    %11 = arith.addf %8, %10 : vector<3x2xf32>
    %c0_10 = arith.constant 0 : index
    %c0_11 = arith.constant 0 : index
    %12 = vector.load %arg6[%c0_10, %c0_11] : memref<3x2xf32, #tpu.memory_space<vmem>>, vector<3x2xf32>
    tpu.vector_store %arg6[%c0_10, %c0_11], %11 {strides = array<i32>} : memref<3x2xf32, #tpu.memory_space<vmem>>, vector<3x2xf32>,
    return
  }
  func.func @transform_0(%arg0: i32) -> (i32, i32) {
    %c0_i32 = arith.constant 0 : i32
    %c0_i32_0 = arith.constant 0 : i32
    return %c0_i32, %arg0 : i32, i32
  }
  func.func @transform_1(%arg0: i32) -> (i32, i32) {
    %c0_i32 = arith.constant 0 : i32
    %c0_i32_0 = arith.constant 0 : i32
    %c0_i32_1 = arith.constant 0 : i32
    return %c0_i32, %c0_i32_0 : i32, i32
  }
  func.func @transform_2(%arg0: i32) -> (i32, i32) {
    %c0_i32 = arith.constant 0 : i32
    %c0_i32_0 = arith.constant 0 : i32
    %c0_i32_1 = arith.constant 0 : i32
    return %c0_i32, %c0_i32_0 : i32, i32
  }
  func.func @transform_3(%arg0: i32) -> (i32, i32) {
    %c0_i32 = arith.constant 0 : i32
    %c0_i32_0 = arith.constant 0 : i32
    %c0_i32_1 = arith.constant 0 : i32
    return %c0_i32, %c0_i32_0 : i32, i32
  }
  func.func @transform_4(%arg0: i32) -> (i32, i32) {
    %c0_i32 = arith.constant 0 : i32
    %c0_i32_0 = arith.constant 0 : i32
    %c0_i32_1 = arith.constant 0 : i32
    return %c0_i32, %c0_i32_0 : i32, i32
  }
  func.func @transform_5(%arg0: i32) -> (i32, i32) {
    %c0_i32 = arith.constant 0 : i32
    %c0_i32_0 = arith.constant 0 : i32
    return %c0_i32, %arg0 : i32, i32
  }
}

</mosaic_0001>

<llo_original>
// kernel: tpu_custom_call.1
$region0: #{tpu_custom_call.1}
  #allocation0 [shape = 'u32[]', space=smem, size = 0x4, offset = 0x4, fixed_abs, tag = 'smem constant byte address 0x4 - core index']
  #allocation1 [shape = 'u32[144,128]{1,0:T(1,128)}', space=vmem, size = 0x12000, scoped, tag = 'internal scratch']
  %s0 = inlined_call_operand.vmem [shape: f32[6,2], index: 0, kind: input, shape index: {}]
  %s1 = inlined_call_operand.vmem [shape: f32[64,6], index: 1, kind: input, shape index: {}]
  %s2 = inlined_call_operand.vmem [shape: f32[64,1], index: 2, kind: input, shape index: {}]
  %s3 = inlined_call_operand.vmem [shape: f32[3,64], index: 3, kind: input, shape index: {}]
  %s4 = inlined_call_operand.vmem [shape: f32[3,1], index: 4, kind: input, shape index: {}]
  %s5 = inlined_call_operand.vmem [shape: f32[3,2], index: 5, kind: output, shape index: {}]
  %s6 = sld [smem:[#allocation0]]
  $region30: #{tpu_custom_call.1} parent=0
    _
  %s8 = ssub.s32 1, %s6
  %s9 = scalar_select 0, %s8, %s6
  // Predicated region
  $region2: #{tpu_custom_call.1} parent=0 // pred_check
    _
  $region3: #{tpu_custom_call.1} parent=0 // pred_check_branch
    %11 = sbr.rel (0) target = $region5
  $region4: #{tpu_custom_call.1} parent=0 // pred_region
    _
  $region5: #{tpu_custom_call.1} parent=0 // pred_fallthru
    _
  // Predicated region
  $region6: #{tpu_custom_call.1} parent=0 // pred_check
    _
  $region7: #{tpu_custom_call.1} parent=0 // pred_check_branch
    %13 = sbr.rel (0) target = $region9
  $region8: #{tpu_custom_call.1} parent=0 // pred_region
    _
  $region9: #{tpu_custom_call.1} parent=0 // pred_fallthru
    _
  // Predicated region
  $region10: #{tpu_custom_call.1} parent=0 // pred_check
    _
  $region11: #{tpu_custom_call.1} parent=0 // pred_check_branch
    %15 = sbr.rel (0) target = $region13
  $region12: #{tpu_custom_call.1} parent=0 // pred_region
    _
  $region13: #{tpu_custom_call.1} parent=0 // pred_fallthru
    _
  // Predicated region
  $region14: #{tpu_custom_call.1} parent=0 // pred_check
    _
  $region15: #{tpu_custom_call.1} parent=0 // pred_check_branch
    %17 = sbr.rel (0) target = $region17
  $region16: #{tpu_custom_call.1} parent=0 // pred_region
    _
  $region17: #{tpu_custom_call.1} parent=0 // pred_fallthru
    _
  // Predicated region
  $region18: #{tpu_custom_call.1} parent=0 // pred_check
    _
  $region19: #{tpu_custom_call.1} parent=0 // pred_check_branch
    %19 = sbr.rel (0) target = $region21
  $region20: #{tpu_custom_call.1} parent=0 // pred_region
    _
  $region21: #{tpu_custom_call.1} parent=0 // pred_fallthru
    _
  %v20 = vld [vmem:[%s1] sm:$0xff]
  %v21 = vld [vmem:[%s1 + $0x8] sm:$0xff]
  %v22 = vld [vmem:[%s1 + $0x10] sm:$0xff]
  %v23 = vld [vmem:[%s1 + $0x18] sm:$0xff]
  %v24 = vld [vmem:[%s1 + $0x20] sm:$0xff]
  %v25 = vld [vmem:[%s1 + $0x28] sm:$0xff]
  %v26 = vld [vmem:[%s1 + $0x30] sm:$0xff]
  %v27 = vld [vmem:[%s1 + $0x38] sm:$0xff]
  %v28 = vld [vmem:[%s0] sm:$0x3f]
  %v29 = vld [vmem:[%s2] sm:$0xff]
  %v30 = vld [vmem:[%s2 + $0x8] sm:$0xff]
  %v31 = vld [vmem:[%s2 + $0x10] sm:$0xff]
  %v32 = vld [vmem:[%s2 + $0x18] sm:$0xff]
  %v33 = vld [vmem:[%s2 + $0x20] sm:$0xff]
  %v34 = vld [vmem:[%s2 + $0x28] sm:$0xff]
  %v35 = vld [vmem:[%s2 + $0x30] sm:$0xff]
  %v36 = vld [vmem:[%s2 + $0x38] sm:$0xff]
  %38 = vset.pattern.permute.xlu0 0
  %39 = vperm.xlu0 %38, %v29
  %v40 = vpop.permute.xlu0 %39
  %43 = vset.pattern.permute.xlu0 0
  %44 = vperm.xlu0 %43, %v30
  %v45 = vpop.permute.xlu0 %44
  %48 = vset.pattern.permute.xlu0 0
  %49 = vperm.xlu0 %48, %v31
  %v50 = vpop.permute.xlu0 %49
  %53 = vset.pattern.permute.xlu0 0
  %54 = vperm.xlu0 %53, %v32
  %v55 = vpop.permute.xlu0 %54
  %58 = vset.pattern.permute.xlu0 0
  %59 = vperm.xlu0 %58, %v33
  %v60 = vpop.permute.xlu0 %59
  %63 = vset.pattern.permute.xlu0 0
  %64 = vperm.xlu0 %63, %v34
  %v65 = vpop.permute.xlu0 %64
  %68 = vset.pattern.permute.xlu0 0
  %69 = vperm.xlu0 %68, %v35
  %v70 = vpop.permute.xlu0 %69
  %73 = vset.pattern.permute.xlu0 0
  %74 = vperm.xlu0 %73, %v36
  %v75 = vpop.permute.xlu0 %74
  %vm77 = vcmask 48128
  %v79 = vsel %vm77, %v20, 0
  %v82 = vsel %vm77, %v21, 0
  %v85 = vsel %vm77, %v22, 0
  %v88 = vsel %vm77, %v23, 0
  %v91 = vsel %vm77, %v24, 0
  %v94 = vsel %vm77, %v25, 0
  %v97 = vsel %vm77, %v26, 0
  %v100 = vsel %vm77, %v27, 0
  %vm102 = vcmask 1045504
  %v104 = vsel %vm102, %v28, 0
  %106 = vmatprep.subr.mxu0 0.0
  %107 = vmatpush1.msra.mxu0 %v104
  %108 = vmatprep.subr.mxu0 0.0
  %109 = vmatpush1.msra.mxu0 0.0
  %110 = vmatprep.subr.mxu0 0.0
  %111 = vmatpush1.msra.mxu0 0.0
  %112 = vmatprep.subr.mxu0 0.0
  %113 = vmatpush1.msra.mxu0 0.0
  %114 = vmatprep.subr.mxu0 0.0
  %115 = vmatpush1.msra.mxu0 0.0
  %116 = vmatprep.subr.mxu0 0.0
  %117 = vmatpush1.msra.mxu0 0.0
  %118 = vmatprep.subr.mxu0 0.0
  %119 = vmatpush1.msra.mxu0 0.0
  %120 = vmatprep.subr.mxu0 0.0
  %121 = vmatpush1.msra.mxu0 0.0
  %122 = vmatprep.subr.mxu0 0.0
  %123 = vmatpush1.msra.mxu0 0.0
  %124 = vmatprep.subr.mxu0 0.0
  %125 = vmatpush1.msra.mxu0 0.0
  %126 = vmatprep.subr.mxu0 0.0
  %127 = vmatpush1.msra.mxu0 0.0
  %128 = vmatprep.subr.mxu0 0.0
  %129 = vmatpush1.msra.mxu0 0.0
  %130 = vmatprep.subr.mxu0 0.0
  %131 = vmatpush1.msra.mxu0 0.0
  %132 = vmatprep.subr.mxu0 0.0
  %133 = vmatpush1.msra.mxu0 0.0
  %134 = vmatprep.subr.mxu0 0.0
  %135 = vmatpush1.msra.mxu0 0.0
  %136 = vmatprep.subr.mxu0 0.0
  %137 = vmatpush1.msra.mxu0 0.0
  %138 = vmatprep.subr.mxu0 0.0
  %139 = vmatpush1.msra.mxu0 0.0
  %140 = vmatprep.subr.mxu0 0.0
  %141 = vmatpush1.msra.mxu0 0.0
  %142 = vmatprep.subr.mxu0 0.0
  %143 = vmatpush1.msra.mxu0 0.0
  %144 = vmatprep.subr.mxu0 0.0
  %145 = vmatpush1.msra.mxu0 0.0
  %146 = vmatprep.subr.mxu0 0.0
  %147 = vmatpush1.msra.mxu0 0.0
  %148 = vmatprep.subr.mxu0 0.0
  %149 = vmatpush1.msra.mxu0 0.0
  %150 = vmatprep.subr.mxu0 0.0
  %151 = vmatpush1.msra.mxu0 0.0
  %152 = vmatprep.subr.mxu0 0.0
  %153 = vmatpush1.msra.mxu0 0.0
  %154 = vmatprep.subr.mxu0 0.0
  %155 = vmatpush1.msra.mxu0 0.0
  %156 = vmatprep.subr.mxu0 0.0
  %157 = vmatpush1.msra.mxu0 0.0
  %158 = vmatprep.subr.mxu0 0.0
  %159 = vmatpush1.msra.mxu0 0.0
  %160 = vmatprep.subr.mxu0 0.0
  %161 = vmatpush1.msra.mxu0 0.0
  %162 = vmatprep.subr.mxu0 0.0
  %163 = vmatpush1.msra.mxu0 0.0
  %164 = vmatprep.subr.mxu0 0.0
  %165 = vmatpush1.msra.mxu0 0.0
  %166 = vmatprep.subr.mxu0 0.0
  %167 = vmatpush1.msra.mxu0 0.0
  %168 = vmatprep.subr.mxu0 0.0
  %169 = vmatpush1.msra.mxu0 0.0
  %170 = vmatprep.mubr.f32.mxu0 0.0
  %171 = vmatmul.mubr.f32.gmra.mrb[0].mxu0 %v79
  %v172 = vpop.f32.mrb[0].mxu0
  %v173 = vadd.f32 %v40, %v172
  %v174 = vpop.f32.mrb[0].mxu0
  %175 = vmatprep.mubr.f32.mxu0 0.0
  %176 = vmatmul.mubr.f32.gmra.mrb[0].mxu0 %v82
  %v177 = vpop.f32.mrb[0].mxu0
  %v178 = vadd.f32 %v45, %v177
  %v179 = vpop.f32.mrb[0].mxu0
  %180 = vmatprep.mubr.f32.mxu0 0.0
  %181 = vmatmul.mubr.f32.gmra.mrb[0].mxu0 %v85
  %v182 = vpop.f32.mrb[0].mxu0
  %v183 = vadd.f32 %v50, %v182
  %v184 = vpop.f32.mrb[0].mxu0
  %185 = vmatprep.mubr.f32.mxu0 0.0
  %186 = vmatmul.mubr.f32.gmra.mrb[0].mxu0 %v88
  %v187 = vpop.f32.mrb[0].mxu0
  %v188 = vadd.f32 %v55, %v187
  %v189 = vpop.f32.mrb[0].mxu0
  %190 = vmatprep.mubr.f32.mxu0 0.0
  %191 = vmatmul.mubr.f32.gmra.mrb[0].mxu0 %v91
  %v192 = vpop.f32.mrb[0].mxu0
  %v193 = vadd.f32 %v60, %v192
  %v194 = vpop.f32.mrb[0].mxu0
  %195 = vmatprep.mubr.f32.mxu0 0.0
  %196 = vmatmul.mubr.f32.gmra.mrb[0].mxu0 %v94
  %v197 = vpop.f32.mrb[0].mxu0
  %v198 = vadd.f32 %v65, %v197
  %v199 = vpop.f32.mrb[0].mxu0
  %200 = vmatprep.mubr.f32.mxu0 0.0
  %201 = vmatmul.mubr.f32.gmra.mrb[0].mxu0 %v97
  %v202 = vpop.f32.mrb[0].mxu0
  %v203 = vadd.f32 %v70, %v202
  %v204 = vpop.f32.mrb[0].mxu0
  %205 = vmatprep.mubr.f32.mxu0 0.0
  %206 = vmatmul.mubr.f32.gmra.mrb[0].mxu0 %v100
  %v207 = vpop.f32.mrb[0].mxu0
  %v208 = vadd.f32 %v75, %v207
  %v209 = vpop.f32.mrb[0].mxu0
  %210 = vdwg.mxu0
  %v211 = vtanh.pop %v173
  %v212 = vtanh.pop %v178
  %v213 = vtanh.pop %v183
  %v214 = vtanh.pop %v188
  %v215 = vtanh.pop %v193
  %v216 = vtanh.pop %v198
  %v217 = vtanh.pop %v203
  %v218 = vtanh.pop %v208
  %v219 = vld [vmem:[%s3] sm:$0x7]
  %v220 = vld [vmem:[%s4] sm:$0x7]
  %222 = vset.pattern.permute.xlu0 0
  %223 = vperm.xlu0 %222, %v220
  %v224 = vpop.permute.xlu0 %223
  %vm226 = vcmask 523264
  %v228 = vsel %vm226, %v219, 0
  %230 = vmatprep.subr.mxu0 0.0
  %231 = vmatpush1.msra.mxu0 %v211
  %232 = vmatprep.subr.mxu0 0.0
  %233 = vmatpush1.msra.mxu0 %v212
  %234 = vmatprep.subr.mxu0 0.0
  %235 = vmatpush1.msra.mxu0 %v213
  %236 = vmatprep.subr.mxu0 0.0
  %237 = vmatpush1.msra.mxu0 %v214
  %238 = vmatprep.subr.mxu0 0.0
  %239 = vmatpush1.msra.mxu0 %v215
  %240 = vmatprep.subr.mxu0 0.0
  %241 = vmatpush1.msra.mxu0 %v216
  %242 = vmatprep.subr.mxu0 0.0
  %243 = vmatpush1.msra.mxu0 %v217
  %244 = vmatprep.subr.mxu0 0.0
  %245 = vmatpush1.msra.mxu0 %v218
  %246 = vmatprep.subr.mxu0 0.0
  %247 = vmatpush1.msra.mxu0 0.0
  %248 = vmatprep.subr.mxu0 0.0
  %249 = vmatpush1.msra.mxu0 0.0
  %250 = vmatprep.subr.mxu0 0.0
  %251 = vmatpush1.msra.mxu0 0.0
  %252 = vmatprep.subr.mxu0 0.0
  %253 = vmatpush1.msra.mxu0 0.0
  %254 = vmatprep.subr.mxu0 0.0
  %255 = vmatpush1.msra.mxu0 0.0
  %256 = vmatprep.subr.mxu0 0.0
  %257 = vmatpush1.msra.mxu0 0.0
  %258 = vmatprep.subr.mxu0 0.0
  %259 = vmatpush1.msra.mxu0 0.0
  %260 = vmatprep.subr.mxu0 0.0
  %261 = vmatpush1.msra.mxu0 0.0
  %262 = vmatprep.subr.mxu0 0.0
  %263 = vmatpush1.msra.mxu0 0.0
  %264 = vmatprep.subr.mxu0 0.0
  %265 = vmatpush1.msra.mxu0 0.0
  %266 = vmatprep.subr.mxu0 0.0
  %267 = vmatpush1.msra.mxu0 0.0
  %268 = vmatprep.subr.mxu0 0.0
  %269 = vmatpush1.msra.mxu0 0.0
  %270 = vmatprep.subr.mxu0 0.0
  %271 = vmatpush1.msra.mxu0 0.0
  %272 = vmatprep.subr.mxu0 0.0
  %273 = vmatpush1.msra.mxu0 0.0
  %274 = vmatprep.subr.mxu0 0.0
  %275 = vmatpush1.msra.mxu0 0.0
  %276 = vmatprep.subr.mxu0 0.0
  %277 = vmatpush1.msra.mxu0 0.0
  %278 = vmatprep.subr.mxu0 0.0
  %279 = vmatpush1.msra.mxu0 0.0
  %280 = vmatprep.subr.mxu0 0.0
  %281 = vmatpush1.msra.mxu0 0.0
  %282 = vmatprep.subr.mxu0 0.0
  %283 = vmatpush1.msra.mxu0 0.0
  %284 = vmatprep.subr.mxu0 0.0
  %285 = vmatpush1.msra.mxu0 0.0
  %286 = vmatprep.subr.mxu0 0.0
  %287 = vmatpush1.msra.mxu0 0.0
  %288 = vmatprep.subr.mxu0 0.0
  %289 = vmatpush1.msra.mxu0 0.0
  %290 = vmatprep.subr.mxu0 0.0
  %291 = vmatpush1.msra.mxu0 0.0
  %292 = vmatprep.subr.mxu0 0.0
  %293 = vmatpush1.msra.mxu0 0.0
  %294 = vmatprep.mubr.f32.mxu0 0.0
  %295 = vmatmul.mubr.f32.gmra.mrb[0].mxu0 %v228
  %v296 = vpop.f32.mrb[0].mxu0
  %v297 = vadd.f32 %v224, %v296
  %v298 = vpop.f32.mrb[0].mxu0
  %299 = vdwg.mxu0
  %vm300 = vcmask 10240
  %301 = vst.msk [vmem:[%s5] sm:$0x7] %vm300, %v297
  // Predicated region
  $region22: #{tpu_custom_call.1} parent=0 // pred_check
    _
  $region23: #{tpu_custom_call.1} parent=0 // pred_check_branch
    %303 = sbr.rel (0) target = $region25
  $region24: #{tpu_custom_call.1} parent=0 // pred_region
    _
  $region25: #{tpu_custom_call.1} parent=0 // pred_fallthru
    _
  // Predicated region
  $region26: #{tpu_custom_call.1} parent=0 // pred_check
    _
  $region27: #{tpu_custom_call.1} parent=0 // pred_check_branch
    %305 = sbr.rel (0) target = $region29
  $region28: #{tpu_custom_call.1} parent=0 // pred_region
    _
  $region29: #{tpu_custom_call.1} parent=0 // pred_fallthru
    _

</llo_original>
